<compile_context>
chip_gen: v6e
topology: v6e:2x2x1
jax: 0.10.0
libtpu: 0.0.40
codegen_flags: <defaults>
</compile_context>

<pallas_src>
import numpy as np
import jax
import jax.numpy as jnp
from jax.experimental import pallas as pl
from jax.experimental.pallas import tpu as pltpu


def ngf_kernel(y_ref, f_ref):
    # y_ref / f_ref: (2, TR, 128) VMEM tiles. Plane 0 = y1, plane 1 = y2.
    # Compute in f32 (v5e has no bf16 VPU/EUP datapath; no-op for f32 inputs).
    y1 = y_ref[0].astype(jnp.float32)
    y2 = y_ref[1].astype(jnp.float32)
    f_ref[0] = (-jnp.cos(y1) * jnp.cos(y2)).astype(f_ref.dtype)
    f_ref[1] = (jnp.sin(y1) * jnp.sin(y2)).astype(f_ref.dtype)


def ngf_forward(t, y, *, tile_rows=512):
    """Pallas implementation of NGF.forward(t, y). y has shape (..., 2)."""
    del t  # unused, matching the PyTorch module
    orig_shape = y.shape
    dtype = y.dtype
    assert orig_shape[-1] == 2, "last axis must be the 2-dim state (y1, y2)"
    n = int(np.prod(orig_shape[:-1])) if len(orig_shape) > 1 else 1

    LANES = 128
    rows = -(-n // LANES)  # ceil(n / 128)
    if rows <= tile_rows:
        tr = max(8, ((rows + 7) // 8) * 8)     # single tile, sublane-aligned
        m_pad = tr
    else:
        tr = tile_rows                         # ~512 KiB f32 tile per buffer
        m_pad = ((rows + tr - 1) // tr) * tr
    n_pad = m_pad * LANES

    # (..., 2) -> (n, 2) -> (2, n) dense state planes, pad flat batch only
    # (2 rows, not 8), then fold onto (2, Mpad, 128).
    planes = y.reshape(n, 2).T
    planes = jnp.pad(planes, ((0, 0), (0, n_pad - n)))
    planes = planes.reshape(2, m_pad, LANES)

    f_planes = pl.pallas_call(
        ngf_kernel,
        out_shape=jax.ShapeDtypeStruct((2, m_pad, LANES), dtype),
        grid=(m_pad // tr,),
        in_specs=[pl.BlockSpec((2, tr, LANES), lambda i: (0, i, 0))],
        out_specs=pl.BlockSpec((2, tr, LANES), lambda i: (0, i, 0)),
        compiler_params=pltpu.CompilerParams(
            dimension_semantics=("parallel",)),
    )(planes)

    # Pad columns hold don't-care values; slice them off and restore layout.
    f = f_planes.reshape(2, n_pad)[:, :n].T.reshape(orig_shape)
    return f
    # TODO(synk): for tiny n inside an ODE integrator, plain jnp (one XLA
    # fusion) or fusing several RHS evals per pallas_call amortizes the fixed
    # launch/wrapper overhead better than any single-call kernel.


def ngf_forward_ref(t, y):
    """Pure-JAX reference for correctness checking."""
    del t
    y1 = y[..., 0]
    y2 = y[..., 1]
    f0 = -jnp.cos(y1) * jnp.cos(y2)
    f1 = jnp.sin(y1) * jnp.sin(y2)
    return jnp.stack([f0, f1], axis=-1)


if __name__ == "__main__":
    key = jax.random.PRNGKey(0)
    # small shapes consistent with the module: y is (batch, seq, 2)
    y = jax.random.normal(key, (2, 8, 2), dtype=jnp.float32)
    t = jnp.float32(0.0)

    out = ngf_forward(t, y)
    out = jax.block_until_ready(out)

    ref = ngf_forward_ref(t, y)
    np.testing.assert_allclose(np.asarray(out), np.asarray(ref),
                               rtol=1e-5, atol=1e-5)
    assert out.shape == y.shape and out.dtype == y.dtype
    print("KERNEL_OK")
</pallas_src>

<mosaic_0001>
module attributes {stable_mosaic.version = 11 : i64} {
  func.func @ngf_kernel(%arg0: i32, %arg1: memref<2x8x128xf32, #tpu.memory_space<vmem>>, %arg2: memref<2x8x128xf32, #tpu.memory_space<vmem>>) attributes {dimension_semantics = [#tpu.dimension_semantics<parallel>], iteration_bounds = array<i64: 1>, scalar_prefetch = 0 : i64, scratch_operands = 0 : i64, tpu.core_type = #tpu.core_type<tc>, window_params = [{transform_indices = @transform_0, window_bounds = array<i64: 2, 8, 128>}, {transform_indices = @transform_1, window_bounds = array<i64: 2, 8, 128>}]} {
    %c0 = arith.constant 0 : index
    %c0_0 = arith.constant 0 : index
    %c0_1 = arith.constant 0 : index
    %0 = vector.load %arg1[%c0, %c0_0, %c0_1] : memref<2x8x128xf32, #tpu.memory_space<vmem>>, vector<1x8x128xf32>
    %1 = vector.shape_cast %0 : vector<1x8x128xf32> to vector<8x128xf32>
    %c1 = arith.constant 1 : index
    %c0_2 = arith.constant 0 : index
    %c0_3 = arith.constant 0 : index
    %2 = vector.load %arg1[%c1, %c0_2, %c0_3] : memref<2x8x128xf32, #tpu.memory_space<vmem>>, vector<1x8x128xf32>
    %3 = vector.shape_cast %2 : vector<1x8x128xf32> to vector<8x128xf32>
    %4 = math.cos %1 : vector<8x128xf32>
    %cst = arith.constant 0.000000e+00 : f32
    %5 = vector.broadcast %cst : f32 to vector<8x128xf32>
    %6 = arith.subf %5, %4 : vector<8x128xf32>
    %7 = math.cos %3 : vector<8x128xf32>
    %8 = arith.mulf %6, %7 : vector<8x128xf32>
    %c0_4 = arith.constant 0 : index
    %c0_5 = arith.constant 0 : index
    %c0_6 = arith.constant 0 : index
    %9 = vector.load %arg2[%c0_4, %c0_5, %c0_6] : memref<2x8x128xf32, #tpu.memory_space<vmem>>, vector<1x8x128xf32>
    %10 = vector.shape_cast %9 : vector<1x8x128xf32> to vector<8x128xf32>
    %11 = vector.shape_cast %8 : vector<8x128xf32> to vector<1x8x128xf32>
    tpu.vector_store %arg2[%c0_4, %c0_5, %c0_6], %11 {strides = array<i32>} : memref<2x8x128xf32, #tpu.memory_space<vmem>>, vector<1x8x128xf32>,
    %12 = math.sin %1 : vector<8x128xf32>
    %13 = math.sin %3 : vector<8x128xf32>
    %14 = arith.mulf %12, %13 : vector<8x128xf32>
    %c1_7 = arith.constant 1 : index
    %c0_8 = arith.constant 0 : index
    %c0_9 = arith.constant 0 : index
    %15 = vector.load %arg2[%c1_7, %c0_8, %c0_9] : memref<2x8x128xf32, #tpu.memory_space<vmem>>, vector<1x8x128xf32>
    %16 = vector.shape_cast %15 : vector<1x8x128xf32> to vector<8x128xf32>
    %17 = vector.shape_cast %14 : vector<8x128xf32> to vector<1x8x128xf32>
    tpu.vector_store %arg2[%c1_7, %c0_8, %c0_9], %17 {strides = array<i32>} : memref<2x8x128xf32, #tpu.memory_space<vmem>>, vector<1x8x128xf32>,
    return
  }
  func.func @transform_0(%arg0: i32) -> (i32, i32, i32) {
    %c0_i32 = arith.constant 0 : i32
    %c0_i32_0 = arith.constant 0 : i32
    %c0_i32_1 = arith.constant 0 : i32
    return %c0_i32, %arg0, %c0_i32_0 : i32, i32, i32
  }
  func.func @transform_1(%arg0: i32) -> (i32, i32, i32) {
    %c0_i32 = arith.constant 0 : i32
    %c0_i32_0 = arith.constant 0 : i32
    %c0_i32_1 = arith.constant 0 : i32
    return %c0_i32, %arg0, %c0_i32_0 : i32, i32, i32
  }
}

</mosaic_0001>

<llo_original>
// kernel: tpu_custom_call.1
$region0: #{tpu_custom_call.1}
  #allocation0 [shape = 'u32[]', space=smem, size = 0x4, offset = 0x4, fixed_abs, tag = 'smem constant byte address 0x4 - core index']
  #allocation1 [shape = 'u32[144,128]{1,0:T(1,128)}', space=vmem, size = 0x12000, scoped, tag = 'internal scratch']
  %s0 = inlined_call_operand.hbm [shape: f32[2,8,128], index: 0, kind: input, shape index: {}]
  %s1 = inlined_call_operand.hbm [shape: f32[2,8,128], index: 1, kind: output, shape index: {}]
  %s2 = sld [smem:[#allocation0]]
  $region18: #{tpu_custom_call.1} parent=0
    _
  %s4 = ssub.s32 1, %s2
  %s5 = scalar_select 0, %s4, %s2
  $region1: #{tpu_custom_call.1} parent=0
    #allocation2 [shape = 'u8[8192]{0}', space=vmem, size = 0x2000, scoped, tag = 'input window, operand 0, single buffered']
    #allocation3 [shape = 's32[1]{0}', space=sflag, size = 0x4, scoped, tag = 'scoped memory for tpu_custom_call.1']
    #allocation4 [shape = 's32[1]{0}', space=sflag, size = 0x4, scoped, tag = 'scoped memory for tpu_custom_call.1']
    #allocation5 [shape = 'u8[8192]{0}', space=vmem, size = 0x2000, scoped, tag = 'output window, operand 0, single buffered']
    %6 = vsyncpa [#allocation3], 0
    %7 = vsyncpa [#allocation4], 0
    // Predicated region
    $region2: #{tpu_custom_call.1} parent=1 // pred_check
      _
    $region3: #{tpu_custom_call.1} parent=1 // pred_check_branch
      %9 = sbr.rel (0) target = $region5
    $region4: #{tpu_custom_call.1} parent=1 // pred_region
      %s11 = ssub.s32 256, 256
      %12 = vsyncadd [#allocation3], %s11
      %s13 = sshll.u32 [#allocation2], 4
      %s14 = int_to_ptr.vmem [resolvable:$true] %s13
      %19 = dma.hbm_to_vmem [thread:$0]  %s0, 256, %s14, [#allocation3], 128, 128, 8
    $region5: #{tpu_custom_call.1} parent=1 // pred_fallthru
      _
    // Predicated region
    $region6: #{tpu_custom_call.1} parent=1 // pred_check
      _
    $region7: #{tpu_custom_call.1} parent=1 // pred_check_branch
      %21 = sbr.rel (0) target = $region9
    $region8: #{tpu_custom_call.1} parent=1 // pred_region
      %22 = dma.done [#allocation3], 256
    $region9: #{tpu_custom_call.1} parent=1 // pred_fallthru
      _
    %v23 = vld [vmem:[#allocation2] sm:$0xff]
    %s24 = scalar_lea.vmem [#allocation2], 8
    %v25 = vld [vmem:[%s24] sm:$0xff]
    %v26 = vand.u32 2147483647, %v23
    %vm27 = vcmp.le.f32.partialorder %v26, 0.7853982
    %vm28 = vcmp.lt.s32.totalorder %v23, 0
    %v29 = vand.u32 %v23, 2139095040
    %v30 = vshrl.u32 %v29, 23
    %v31 = vsub.s32 %v30, 127
    %v32 = vand.u32 2147483647, %v23
    %v33 = vand.u32 %v32, 8388607
    %v34 = vor.u32 %v33, 8388608
    %v35 = vsub.s32 0, %v34
    %v36 = vadd.s32 %v31, 1
    %vm37 = vcmp.gt.s32.totalorder %v36, 0
    %v38 = vsel %vm37, %v36, 0
    %v39 = vshrl.u32 %v38, 5
    %v40 = vand.u32 %v38, 31
    %v41 = vsub.s32 32, %v40
    %v42 = vshrl.u32 683565275, %v41
    %v43 = vshll.u32 683565275, %v40
    %v44 = vshrl.u32 2475754826, %v41
    %v45 = vor.u32 %v43, %v44
    %v46 = vshll.u32 2475754826, %v40
    %v47 = vshrl.u32 2131351028, %v41
    %v48 = vor.u32 %v46, %v47
    %v49 = vshll.u32 2131351028, %v40
    %v50 = vshrl.u32 2102212464, %v41
    %v51 = vor.u32 %v49, %v50
    %v52 = vshll.u32 2102212464, %v40
    %v53 = vshrl.u32 920167782, %v41
    %v54 = vor.u32 %v52, %v53
    %v55 = vshll.u32 920167782, %v40
    %v56 = vshrl.u32 1326507024, %v41
    %v57 = vor.u32 %v55, %v56
    %vm58 = vcmp.lt.s32.totalorder %v39, 1
    %vm59 = vcmp.lt.s32.totalorder %v39, 2
    %vm60 = vcmp.lt.s32.totalorder %v39, 3
    %vm61 = vcmp.lt.s32.totalorder %v39, 4
    %v62 = vsel %vm58, %v42, %v45
    %v63 = vsel %vm61, %v51, 2102212464
    %v64 = vsel %vm60, %v48, %v63
    %v65 = vsel %vm59, %v62, %v64
    %v66 = vsel %vm58, %v45, %v48
    %v67 = vsel %vm61, %v54, 920167782
    %v68 = vsel %vm60, %v51, %v67
    %v69 = vsel %vm59, %v66, %v68
    %v70 = vsel %vm58, %v48, %v51
    %v71 = vsel %vm61, %v57, 1326507024
    %v72 = vsel %vm60, %v54, %v71
    %v73 = vsel %vm59, %v70, %v72
    %v74 = vshll.u32 %v34, 8
    %v75 = vmul.u32.u64.compose %v74, %v73
    %v76 = vextract.low.u32 %v75
    %v77 = vextract.high.u32 %v75
    %v78 = vmul.u32.u64.compose %v74, %v69
    %v79 = vextract.low.u32 %v78
    %v80 = vextract.high.u32 %v78
    %v81 = vmul.u32 %v74, %v65
    %v82 = vadd.s32 %v77, %v79
    %vm83 = vc.u32 %v77, %v79
    %v84 = vadd.s32 %v80, 1
    %v85 = vsel %vm83, %v84, %v80
    %v86 = vadd.s32 %v81, %v85
    %v87 = vadd.s32 %v86, 536870912
    %v88 = vshrl.u32 %v87, 30
    %v89 = vshll.u32 %v88, 30
    %v90 = vsub.s32 %v86, %v89
    %vm91 = vcmp.lt.s32.totalorder %v90, 0
    %v92 = vsub.s32 0, %v90
    %v93 = vsel %vm91, %v92, %v90
    %v94 = vclz %v93
    %v95 = vsub.s32 %v94, 2
    %vm96 = vcmp.gt.s32.totalorder 0, %v95
    %v97 = vsel %vm96, 0, %v95
    %v98 = vsub.s32 32, %v97
    %v99 = vshll.u32 %v90, %v97
    %v100 = vshrl.u32 %v82, %v98
    %v101 = vor.u32 %v99, %v100
    %v102 = vsub.s32 4294967266, %v97
    %v103 = vadd.s32 %v102, 127
    %v104 = vshll.u32 %v103, 23
    %v105 = vor.u32 4788187, %v104
    %v106 = vand.u32 2147483647, %v105
    %v108 = vcvt.s32.f32 %v101
    %v109 = vmul.f32 %v108, %v106
    %v110 = vxor.u32 %v109, 2147483648
    %v111 = vsel %vm28, %v110, %v109
    %v112 = vsub.s32 4, %v88
    %v113 = vsel %vm28, %v112, %v88
    %v114 = vsel %vm27, %v23, %v111
    %v115 = vsel %vm27, 0, %v113
    %v116 = vcosq.f32.pop %v114
    %v117 = vsinq.f32.pop %v114
    %vm118 = vweird.f32 %v23
    %v119 = vand.u32 %v115, 3
    %vm120 = vcmp.lt.s32.totalorder %v119, 2
    %vm121 = vcmp.eq.s32.totalorder %v119, 0
    %v122 = vxor.u32 %v117, 2147483648
    %v123 = vsel %vm121, %v116, %v122
    %vm124 = vcmp.eq.s32.totalorder %v119, 2
    %v125 = vxor.u32 %v116, 2147483648
    %v126 = vsel %vm124, %v125, %v117
    %v127 = vsel %vm120, %v123, %v126
    %v128 = vsel %vm118, nan, %v127
    %v129 = vsub.f32 0.0, %v128
    %v130 = vand.u32 2147483647, %v25
    %vm131 = vcmp.le.f32.partialorder %v130, 0.7853982
    %vm132 = vcmp.lt.s32.totalorder %v25, 0
    %v133 = vand.u32 %v25, 2139095040
    %v134 = vshrl.u32 %v133, 23
    %v135 = vsub.s32 %v134, 127
    %v136 = vand.u32 2147483647, %v25
    %v137 = vand.u32 %v136, 8388607
    %v138 = vor.u32 %v137, 8388608
    %v139 = vsub.s32 0, %v138
    %v140 = vadd.s32 %v135, 1
    %vm141 = vcmp.gt.s32.totalorder %v140, 0
    %v142 = vsel %vm141, %v140, 0
    %v143 = vshrl.u32 %v142, 5
    %v144 = vand.u32 %v142, 31
    %v145 = vsub.s32 32, %v144
    %v146 = vshrl.u32 683565275, %v145
    %v147 = vshll.u32 683565275, %v144
    %v148 = vshrl.u32 2475754826, %v145
    %v149 = vor.u32 %v147, %v148
    %v150 = vshll.u32 2475754826, %v144
    %v151 = vshrl.u32 2131351028, %v145
    %v152 = vor.u32 %v150, %v151
    %v153 = vshll.u32 2131351028, %v144
    %v154 = vshrl.u32 2102212464, %v145
    %v155 = vor.u32 %v153, %v154
    %v156 = vshll.u32 2102212464, %v144
    %v157 = vshrl.u32 920167782, %v145
    %v158 = vor.u32 %v156, %v157
    %v159 = vshll.u32 920167782, %v144
    %v160 = vshrl.u32 1326507024, %v145
    %v161 = vor.u32 %v159, %v160
    %vm162 = vcmp.lt.s32.totalorder %v143, 1
    %vm163 = vcmp.lt.s32.totalorder %v143, 2
    %vm164 = vcmp.lt.s32.totalorder %v143, 3
    %vm165 = vcmp.lt.s32.totalorder %v143, 4
    %v166 = vsel %vm162, %v146, %v149
    %v167 = vsel %vm165, %v155, 2102212464
    %v168 = vsel %vm164, %v152, %v167
    %v169 = vsel %vm163, %v166, %v168
    %v170 = vsel %vm162, %v149, %v152
    %v171 = vsel %vm165, %v158, 920167782
    %v172 = vsel %vm164, %v155, %v171
    %v173 = vsel %vm163, %v170, %v172
    %v174 = vsel %vm162, %v152, %v155
    %v175 = vsel %vm165, %v161, 1326507024
    %v176 = vsel %vm164, %v158, %v175
    %v177 = vsel %vm163, %v174, %v176
    %v178 = vshll.u32 %v138, 8
    %v179 = vmul.u32.u64.compose %v178, %v177
    %v180 = vextract.low.u32 %v179
    %v181 = vextract.high.u32 %v179
    %v182 = vmul.u32.u64.compose %v178, %v173
    %v183 = vextract.low.u32 %v182
    %v184 = vextract.high.u32 %v182
    %v185 = vmul.u32 %v178, %v169
    %v186 = vadd.s32 %v181, %v183
    %vm187 = vc.u32 %v181, %v183
    %v188 = vadd.s32 %v184, 1
    %v189 = vsel %vm187, %v188, %v184
    %v190 = vadd.s32 %v185, %v189
    %v191 = vadd.s32 %v190, 536870912
    %v192 = vshrl.u32 %v191, 30
    %v193 = vshll.u32 %v192, 30
    %v194 = vsub.s32 %v190, %v193
    %vm195 = vcmp.lt.s32.totalorder %v194, 0
    %v196 = vsub.s32 0, %v194
    %v197 = vsel %vm195, %v196, %v194
    %v198 = vclz %v197
    %v199 = vsub.s32 %v198, 2
    %vm200 = vcmp.gt.s32.totalorder 0, %v199
    %v201 = vsel %vm200, 0, %v199
    %v202 = vsub.s32 32, %v201
    %v203 = vshll.u32 %v194, %v201
    %v204 = vshrl.u32 %v186, %v202
    %v205 = vor.u32 %v203, %v204
    %v206 = vsub.s32 4294967266, %v201
    %v207 = vadd.s32 %v206, 127
    %v208 = vshll.u32 %v207, 23
    %v209 = vor.u32 4788187, %v208
    %v210 = vand.u32 2147483647, %v209
    %v212 = vcvt.s32.f32 %v205
    %v213 = vmul.f32 %v212, %v210
    %v214 = vxor.u32 %v213, 2147483648
    %v215 = vsel %vm132, %v214, %v213
    %v216 = vsub.s32 4, %v192
    %v217 = vsel %vm132, %v216, %v192
    %v218 = vsel %vm131, %v25, %v215
    %v219 = vsel %vm131, 0, %v217
    %v220 = vcosq.f32.pop %v218
    %v221 = vsinq.f32.pop %v218
    %vm222 = vweird.f32 %v25
    %v223 = vand.u32 %v219, 3
    %vm224 = vcmp.lt.s32.totalorder %v223, 2
    %vm225 = vcmp.eq.s32.totalorder %v223, 0
    %v226 = vxor.u32 %v221, 2147483648
    %v227 = vsel %vm225, %v220, %v226
    %vm228 = vcmp.eq.s32.totalorder %v223, 2
    %v229 = vxor.u32 %v220, 2147483648
    %v230 = vsel %vm228, %v229, %v221
    %v231 = vsel %vm224, %v227, %v230
    %v232 = vsel %vm222, nan, %v231
    %v233 = vmul.f32 %v129, %v232
    %234 = vst [vmem:[#allocation5] sm:$0xff] %v233
    %v235 = vand.u32 2147483647, %v23
    %vm236 = vcmp.le.f32.partialorder %v235, 0.7853982
    %vm237 = vcmp.lt.s32.totalorder %v23, 0
    %v238 = vand.u32 %v23, 2139095040
    %v239 = vshrl.u32 %v238, 23
    %v240 = vsub.s32 %v239, 127
    %v241 = vand.u32 2147483647, %v23
    %v242 = vand.u32 %v241, 8388607
    %v243 = vor.u32 %v242, 8388608
    %v244 = vsub.s32 0, %v243
    %v245 = vadd.s32 %v240, 1
    %vm246 = vcmp.gt.s32.totalorder %v245, 0
    %v247 = vsel %vm246, %v245, 0
    %v248 = vshrl.u32 %v247, 5
    %v249 = vand.u32 %v247, 31
    %v250 = vsub.s32 32, %v249
    %v251 = vshrl.u32 683565275, %v250
    %v252 = vshll.u32 683565275, %v249
    %v253 = vshrl.u32 2475754826, %v250
    %v254 = vor.u32 %v252, %v253
    %v255 = vshll.u32 2475754826, %v249
    %v256 = vshrl.u32 2131351028, %v250
    %v257 = vor.u32 %v255, %v256
    %v258 = vshll.u32 2131351028, %v249
    %v259 = vshrl.u32 2102212464, %v250
    %v260 = vor.u32 %v258, %v259
    %v261 = vshll.u32 2102212464, %v249
    %v262 = vshrl.u32 920167782, %v250
    %v263 = vor.u32 %v261, %v262
    %v264 = vshll.u32 920167782, %v249
    %v265 = vshrl.u32 1326507024, %v250
    %v266 = vor.u32 %v264, %v265
    %vm267 = vcmp.lt.s32.totalorder %v248, 1
    %vm268 = vcmp.lt.s32.totalorder %v248, 2
    %vm269 = vcmp.lt.s32.totalorder %v248, 3
    %vm270 = vcmp.lt.s32.totalorder %v248, 4
    %v271 = vsel %vm267, %v251, %v254
    %v272 = vsel %vm270, %v260, 2102212464
    %v273 = vsel %vm269, %v257, %v272
    %v274 = vsel %vm268, %v271, %v273
    %v275 = vsel %vm267, %v254, %v257
    %v276 = vsel %vm270, %v263, 920167782
    %v277 = vsel %vm269, %v260, %v276
    %v278 = vsel %vm268, %v275, %v277
    %v279 = vsel %vm267, %v257, %v260
    %v280 = vsel %vm270, %v266, 1326507024
    %v281 = vsel %vm269, %v263, %v280
    %v282 = vsel %vm268, %v279, %v281
    %v283 = vshll.u32 %v243, 8
    %v284 = vmul.u32.u64.compose %v283, %v282
    %v285 = vextract.low.u32 %v284
    %v286 = vextract.high.u32 %v284
    %v287 = vmul.u32.u64.compose %v283, %v278
    %v288 = vextract.low.u32 %v287
    %v289 = vextract.high.u32 %v287
    %v290 = vmul.u32 %v283, %v274
    %v291 = vadd.s32 %v286, %v288
    %vm292 = vc.u32 %v286, %v288
    %v293 = vadd.s32 %v289, 1
    %v294 = vsel %vm292, %v293, %v289
    %v295 = vadd.s32 %v290, %v294
    %v296 = vadd.s32 %v295, 536870912
    %v297 = vshrl.u32 %v296, 30
    %v298 = vshll.u32 %v297, 30
    %v299 = vsub.s32 %v295, %v298
    %vm300 = vcmp.lt.s32.totalorder %v299, 0
    %v301 = vsub.s32 0, %v299
    %v302 = vsel %vm300, %v301, %v299
    %v303 = vclz %v302
    %v304 = vsub.s32 %v303, 2
    %vm305 = vcmp.gt.s32.totalorder 0, %v304
    %v306 = vsel %vm305, 0, %v304
    %v307 = vsub.s32 32, %v306
    %v308 = vshll.u32 %v299, %v306
    %v309 = vshrl.u32 %v291, %v307
    %v310 = vor.u32 %v308, %v309
    %v311 = vsub.s32 4294967266, %v306
    %v312 = vadd.s32 %v311, 127
    %v313 = vshll.u32 %v312, 23
    %v314 = vor.u32 4788187, %v313
    %v315 = vand.u32 2147483647, %v314
    %v317 = vcvt.s32.f32 %v310
    %v318 = vmul.f32 %v317, %v315
    %v319 = vxor.u32 %v318, 2147483648
    %v320 = vsel %vm237, %v319, %v318
    %v321 = vsub.s32 4, %v297
    %v322 = vsel %vm237, %v321, %v297
    %v323 = vsel %vm236, %v23, %v320
    %v324 = vsel %vm236, 0, %v322
    %v325 = vcosq.f32.pop %v323
    %v326 = vsinq.f32.pop %v323
    %vm327 = vweird.f32 %v23
    %v328 = vadd.s32 %v324, 3
    %v329 = vand.u32 %v328, 3
    %vm330 = vcmp.lt.s32.totalorder %v329, 2
    %vm331 = vcmp.eq.s32.totalorder %v329, 0
    %v332 = vxor.u32 %v326, 2147483648
    %v333 = vsel %vm331, %v325, %v332
    %vm334 = vcmp.eq.s32.totalorder %v329, 2
    %v335 = vxor.u32 %v325, 2147483648
    %v336 = vsel %vm334, %v335, %v326
    %v337 = vsel %vm330, %v333, %v336
    %v338 = vsel %vm327, nan, %v337
    %v339 = vand.u32 2147483647, %v25
    %vm340 = vcmp.le.f32.partialorder %v339, 0.7853982
    %vm341 = vcmp.lt.s32.totalorder %v25, 0
    %v342 = vand.u32 %v25, 2139095040
    %v343 = vshrl.u32 %v342, 23
    %v344 = vsub.s32 %v343, 127
    %v345 = vand.u32 2147483647, %v25
    %v346 = vand.u32 %v345, 8388607
    %v347 = vor.u32 %v346, 8388608
    %v348 = vsub.s32 0, %v347
    %v349 = vadd.s32 %v344, 1
    %vm350 = vcmp.gt.s32.totalorder %v349, 0
    %v351 = vsel %vm350, %v349, 0
    %v352 = vshrl.u32 %v351, 5
    %v353 = vand.u32 %v351, 31
    %v354 = vsub.s32 32, %v353
    %v355 = vshrl.u32 683565275, %v354
    %v356 = vshll.u32 683565275, %v353
    %v357 = vshrl.u32 2475754826, %v354
    %v358 = vor.u32 %v356, %v357
    %v359 = vshll.u32 2475754826, %v353
    %v360 = vshrl.u32 2131351028, %v354
    %v361 = vor.u32 %v359, %v360
    %v362 = vshll.u32 2131351028, %v353
    %v363 = vshrl.u32 2102212464, %v354
    %v364 = vor.u32 %v362, %v363
    %v365 = vshll.u32 2102212464, %v353
    %v366 = vshrl.u32 920167782, %v354
    %v367 = vor.u32 %v365, %v366
    %v368 = vshll.u32 920167782, %v353
    %v369 = vshrl.u32 1326507024, %v354
    %v370 = vor.u32 %v368, %v369
    %vm371 = vcmp.lt.s32.totalorder %v352, 1
    %vm372 = vcmp.lt.s32.totalorder %v352, 2
    %vm373 = vcmp.lt.s32.totalorder %v352, 3
    %vm374 = vcmp.lt.s32.totalorder %v352, 4
    %v375 = vsel %vm371, %v355, %v358
    %v376 = vsel %vm374, %v364, 2102212464
    %v377 = vsel %vm373, %v361, %v376
    %v378 = vsel %vm372, %v375, %v377
    %v379 = vsel %vm371, %v358, %v361
    %v380 = vsel %vm374, %v367, 920167782
    %v381 = vsel %vm373, %v364, %v380
    %v382 = vsel %vm372, %v379, %v381
    %v383 = vsel %vm371, %v361, %v364
    %v384 = vsel %vm374, %v370, 1326507024
    %v385 = vsel %vm373, %v367, %v384
    %v386 = vsel %vm372, %v383, %v385
    %v387 = vshll.u32 %v347, 8
    %v388 = vmul.u32.u64.compose %v387, %v386
    %v389 = vextract.low.u32 %v388
    %v390 = vextract.high.u32 %v388
    %v391 = vmul.u32.u64.compose %v387, %v382
    %v392 = vextract.low.u32 %v391
    %v393 = vextract.high.u32 %v391
    %v394 = vmul.u32 %v387, %v378
    %v395 = vadd.s32 %v390, %v392
    %vm396 = vc.u32 %v390, %v392
    %v397 = vadd.s32 %v393, 1
    %v398 = vsel %vm396, %v397, %v393
    %v399 = vadd.s32 %v394, %v398
    %v400 = vadd.s32 %v399, 536870912
    %v401 = vshrl.u32 %v400, 30
    %v402 = vshll.u32 %v401, 30
    %v403 = vsub.s32 %v399, %v402
    %vm404 = vcmp.lt.s32.totalorder %v403, 0
    %v405 = vsub.s32 0, %v403
    %v406 = vsel %vm404, %v405, %v403
    %v407 = vclz %v406
    %v408 = vsub.s32 %v407, 2
    %vm409 = vcmp.gt.s32.totalorder 0, %v408
    %v410 = vsel %vm409, 0, %v408
    %v411 = vsub.s32 32, %v410
    %v412 = vshll.u32 %v403, %v410
    %v413 = vshrl.u32 %v395, %v411
    %v414 = vor.u32 %v412, %v413
    %v415 = vsub.s32 4294967266, %v410
    %v416 = vadd.s32 %v415, 127
    %v417 = vshll.u32 %v416, 23
    %v418 = vor.u32 4788187, %v417
    %v419 = vand.u32 2147483647, %v418
    %v421 = vcvt.s32.f32 %v414
    %v422 = vmul.f32 %v421, %v419
    %v423 = vxor.u32 %v422, 2147483648
    %v424 = vsel %vm341, %v423, %v422
    %v425 = vsub.s32 4, %v401
    %v426 = vsel %vm341, %v425, %v401
    %v427 = vsel %vm340, %v25, %v424
    %v428 = vsel %vm340, 0, %v426
    %v429 = vcosq.f32.pop %v427
    %v430 = vsinq.f32.pop %v427
    %vm431 = vweird.f32 %v25
    %v432 = vadd.s32 %v428, 3
    %v433 = vand.u32 %v432, 3
    %vm434 = vcmp.lt.s32.totalorder %v433, 2
    %vm435 = vcmp.eq.s32.totalorder %v433, 0
    %v436 = vxor.u32 %v430, 2147483648
    %v437 = vsel %vm435, %v429, %v436
    %vm438 = vcmp.eq.s32.totalorder %v433, 2
    %v439 = vxor.u32 %v429, 2147483648
    %v440 = vsel %vm438, %v439, %v430
    %v441 = vsel %vm434, %v437, %v440
    %v442 = vsel %vm431, nan, %v441
    %v443 = vmul.f32 %v338, %v442
    %s444 = scalar_lea.vmem [#allocation5], 8
    %445 = vst [vmem:[%s444] sm:$0xff] %v443
    // Predicated region
    $region10: #{tpu_custom_call.1} parent=1 // pred_check
      _
    $region11: #{tpu_custom_call.1} parent=1 // pred_check_branch
      %447 = sbr.rel (0) target = $region13
    $region12: #{tpu_custom_call.1} parent=1 // pred_region
      %s449 = ssub.s32 256, 256
      %450 = vsyncadd [#allocation4], %s449
      %s451 = sshll.u32 [#allocation5], 4
      %s452 = int_to_ptr.vmem [resolvable:$true] %s451
      %457 = dma.vmem_to_hbm [thread:$0]  %s452, 256, %s1, [#allocation4], 128, 128, 8
    $region13: #{tpu_custom_call.1} parent=1 // pred_fallthru
      _
    // Predicated region
    $region14: #{tpu_custom_call.1} parent=1 // pred_check
      _
    $region15: #{tpu_custom_call.1} parent=1 // pred_check_branch
      %459 = sbr.rel (0) target = $region17
    $region16: #{tpu_custom_call.1} parent=1 // pred_region
      %460 = dma.done [#allocation4], 256
    $region17: #{tpu_custom_call.1} parent=1 // pred_fallthru
      _
    %461 = vsyncpa [#allocation3], 1
    %462 = vsyncpa [#allocation4], 1

</llo_original>
